<compile_context>
chip_gen: v5e
topology: v5e:2x2
jax: 0.10.0
libtpu: 0.0.40
codegen_flags: <defaults>
</compile_context>

<pallas_src>
import functools

import numpy as np
import jax
import jax.numpy as jnp
from jax import lax
from jax.experimental import pallas as pl
from jax.experimental.pallas import tpu as pltpu

SQRT2 = float(np.sqrt(2.0))
DEFAULT_COMPUTE_DTYPE = jnp.bfloat16      # MXU-native matmul input dtype


# ---------------------------------------------------------------------------
# VMEM budgets (generation aware)
# ---------------------------------------------------------------------------

def _vmem_capacity_bytes():
    try:
        cap = int(pltpu.get_tpu_info().vmem_capacity_bytes)
        if cap > 0:
            return cap
    except Exception:
        pass
    return 64 * 1024 * 1024               # conservative: v7x per-TensorCore VMEM


_VMEM_CAP_BYTES = _vmem_capacity_bytes()
# Explicit scoped-VMEM limit (overrides v5e's 16 MiB default): 96 MiB on v5e/v6e,
# 48 MiB on v7x.
_VMEM_LIMIT_BYTES = min(_VMEM_CAP_BYTES * 3 // 4, 96 * 1024 * 1024)
# Per-call working-set budget for tiled kernels (double-buffered tiles).
_TILE_BUDGET_BYTES = min(_VMEM_CAP_BYTES * 4 // 10, 48 * 1024 * 1024)
# Hard cap for the grid-less whole-array path (kept small so realistic FC sizes
# take the pipelined tiled path).
_WHOLE_BUDGET_BYTES = min(_VMEM_CAP_BYTES // 8, 8 * 1024 * 1024)


def _compiler_params(dims=None):
    return pltpu.CompilerParams(dimension_semantics=dims,
                                vmem_limit_bytes=_VMEM_LIMIT_BYTES)


def _mm_precision(compute_dtype):
    return (lax.Precision.HIGHEST
            if jnp.dtype(compute_dtype) == jnp.dtype(jnp.float32)
            else lax.Precision.DEFAULT)


# ---------------------------------------------------------------------------
# bias_act epilogue (bias add -> activation -> gain -> optional clamp, all f32)
# ---------------------------------------------------------------------------

def _epilogue(y, b, activation, act_gain, clamp):
    if b is not None:
        y = y + b
    if activation == "lrelu":
        y = jnp.where(y >= 0, y, 0.2 * y)
    elif activation != "linear":
        raise NotImplementedError(activation)
    if act_gain != 1.0:
        y = y * act_gain
    if clamp is not None:
        y = jnp.clip(y, -clamp, clamp)
    return y


# ---------------------------------------------------------------------------
# Generic matmul + bias + activation kernels (FC layers)
# ---------------------------------------------------------------------------

def _mm_whole_kernel(x_ref, wt_ref, *rest, activation, act_gain, clamp,
                     has_bias, compute_dtype, precision):
    """Single-block kernel: y = x @ w_t (+ b) -> act.  No accumulator, no K axis."""
    if has_bias:
        b_ref, o_ref = rest
    else:
        (o_ref,) = rest
    y = jnp.dot(x_ref[...].astype(compute_dtype),
                wt_ref[...].astype(compute_dtype),
                preferred_element_type=jnp.float32, precision=precision)
    y = _epilogue(y, b_ref[...] if has_bias else None, activation, act_gain, clamp)
    o_ref[...] = y.astype(o_ref.dtype)


def _mm_ksplit_kernel(x_ref, wt_ref, *rest, activation, act_gain, clamp,
                      has_bias, compute_dtype, precision):
    """K-split kernel: accumulates directly into the f32 output block (no scratch)."""
    if has_bias:
        b_ref, o_ref = rest
    else:
        (o_ref,) = rest
    k = pl.program_id(2)

    @pl.when(k == 0)
    def _():
        o_ref[...] = jnp.zeros_like(o_ref)

    o_ref[...] += jnp.dot(x_ref[...].astype(compute_dtype),
                          wt_ref[...].astype(compute_dtype),
                          preferred_element_type=jnp.float32, precision=precision)

    @pl.when(k == pl.num_programs(2) - 1)
    def _():
        o_ref[...] = _epilogue(o_ref[...], b_ref[...] if has_bias else None,
                               activation, act_gain, clamp)


def _pick_tile(dim, cap, quantum):
    """Largest multiple of `quantum` that divides `dim`, capped at `cap`."""
    t = min(cap, dim)
    t -= t % quantum
    while t > quantum and dim % t != 0:
        t -= quantum
    return max(t, quantum)


def matmul_bias_act(x, w_t, bias=None, *, activation="linear", act_gain=1.0,
                    clamp=None, compute_dtype=None, tm=None, tn=None, tk=None):
    """y = act((x @ w_t) + bias) * act_gain, computed inside Pallas.

    x: [M, K] (cast to f32); w_t: [K, N] (gains folded / transposed at prep time,
    cast to the compute dtype); bias: [N] f32 or None (dropped from the kernel)."""
    if compute_dtype is None:
        compute_dtype = DEFAULT_COMPUTE_DTYPE
    precision = _mm_precision(compute_dtype)
    M, K = x.shape
    K2, N = w_t.shape
    assert K == K2, (K, K2)
    x = x.astype(jnp.float32)
    w_t = w_t.astype(compute_dtype)
    has_bias = bias is not None
    b2 = jnp.asarray(bias, jnp.float32).reshape(1, N) if has_bias else None

    w_item = jnp.dtype(compute_dtype).itemsize
    total_bytes = M * K * 4 + K * N * w_item + M * N * 4 + (N * 4 if has_bias else 0)
    tileable = (M % 8 == 0) and (N % 128 == 0) and (K % 128 == 0)
    explicit = any(t is not None for t in (tm, tn, tk))

    args = (x, w_t) + ((b2,) if has_bias else ())
    out_shape = jax.ShapeDtypeStruct((M, N), jnp.float32)
    static = dict(activation=activation, act_gain=float(act_gain),
                  clamp=None if clamp is None else float(clamp),
                  has_bias=has_bias, compute_dtype=compute_dtype,
                  precision=precision)

    if not explicit:
        # ---- small problems: one invocation, whole arrays in VMEM (hard cap) ----
        if total_bytes <= _WHOLE_BUDGET_BYTES:
            kernel = functools.partial(_mm_whole_kernel, **static)
            return pl.pallas_call(kernel, out_shape=out_shape,
                                  compiler_params=_compiler_params())(*args)
        # ---- big but unaligned: zero-pad to (8,128) alignment, use tiled path ----
        if not tileable:
            Mp = -(-M // 8) * 8
            Kp = -(-K // 128) * 128
            Np = -(-N // 128) * 128
            xp = jnp.pad(x, ((0, Mp - M), (0, Kp - K)))
            wp = jnp.pad(w_t, ((0, Kp - K), (0, Np - N)))
            bp = (jnp.pad(jnp.asarray(bias, jnp.float32), (0, Np - N))
                  if has_bias else None)
            y = matmul_bias_act(xp, wp, bp, activation=activation,
                                act_gain=act_gain, clamp=clamp,
                                compute_dtype=compute_dtype)
            return y[:M, :N]
    else:
        assert tileable, "explicit tile sizes require (M%8, N%128, K%128) == 0"

    # ---- tiled path --------------------------------------------------------------
    auto_tm, auto_tn = tm is None, tn is None
    if auto_tm:
        tm = _pick_tile(M, 256, 8)
    if auto_tn:
        tn = _pick_tile(N, 512, 128)        # lane-dense output blocks
    # Keep >=2 output blocks along a parallel axis so both v7x TensorCores get work.
    if (M // tm) * (N // tn) == 1:
        if auto_tn and N >= 256:
            tn = _pick_tile(N, N // 2, 128)
        elif auto_tm and M >= 16:
            tm = _pick_tile(M, M // 2, 8)
    if tk is None:
        tk = K                              # prefer collapsing K entirely

        def _need(tk_):
            return (2 * (tm * tk_ * 4 + tk_ * tn * w_item)   # double-buffered inputs
                    + 2 * tm * tn * 4                         # f32 output block
                    + (2 * tn * 4 if has_bias else 0))

        while tk > 128 and _need(tk) > _TILE_BUDGET_BYTES:
            tk = _pick_tile(K, tk // 2, 128)
    assert M % tm == 0 and N % tn == 0 and K % tk == 0, (M, N, K, tm, tn, tk)
    grid_m, grid_n, grid_k = M // tm, N // tn, K // tk

    if grid_k == 1:
        kernel = functools.partial(_mm_whole_kernel, **static)
        in_specs = [pl.BlockSpec((tm, K), lambda i, j: (i, 0)),
                    pl.BlockSpec((K, tn), lambda i, j: (0, j))]
        if has_bias:
            in_specs.append(pl.BlockSpec((1, tn), lambda i, j: (0, j)))
        out_specs = pl.BlockSpec((tm, tn), lambda i, j: (i, j))
        grid = (grid_m, grid_n)
        dims = ("parallel", "parallel")
    else:
        kernel = functools.partial(_mm_ksplit_kernel, **static)
        in_specs = [pl.BlockSpec((tm, tk), lambda i, j, k: (i, k)),
                    pl.BlockSpec((tk, tn), lambda i, j, k: (k, j))]
        if has_bias:
            in_specs.append(pl.BlockSpec((1, tn), lambda i, j, k: (0, j)))
        out_specs = pl.BlockSpec((tm, tn), lambda i, j, k: (i, j))
        grid = (grid_m, grid_n, grid_k)
        dims = ("parallel", "parallel", "arbitrary")

    return pl.pallas_call(
        kernel,
        out_shape=out_shape,
        grid_spec=pltpu.PrefetchScalarGridSpec(
            num_scalar_prefetch=0, grid=grid,
            in_specs=in_specs, out_specs=out_specs),
        compiler_params=_compiler_params(dims),
    )(*args)


# ---------------------------------------------------------------------------
# Fused 3x3 "same" conv (+ folded minibatch-std channel) + bias_act
# ---------------------------------------------------------------------------

def _conv3x3_kernel(x_ref, w_ref, gmap_ref, b_ref, o_ref, *, H, W, Wp,
                    activation, act_gain, clamp, compute_dtype, precision):
    """Per-sample fused conv.

    x_ref:    (1, Hp*Wp, Cin)  zero-padded NHWC sample, flat spatial rows
    w_ref:    (9, Cin, tco)    conv taps (t = dh*3 + dw)
    gmap_ref: (1, H*Wp, tco)   this sample's minibatch-std channel contribution
    b_ref:    (1, tco)
    o_ref:    (1, H, W, tco)
    """
    HWp = H * Wp
    acc = gmap_ref[0].astype(jnp.float32)
    for t in range(9):                      # 9 shifted MXU matmuls, no im2col
        off = (t // 3) * Wp + (t % 3)
        xs = x_ref[0, off:off + HWp, :].astype(compute_dtype)
        acc = acc + jnp.dot(xs, w_ref[t].astype(compute_dtype),
                            preferred_element_type=jnp.float32,
                            precision=precision)
    y = _epilogue(acc, b_ref[...], activation, act_gain, clamp)
    for h in range(H):                      # drop the padded-width columns
        o_ref[0, h, :, :] = y[h * Wp:h * Wp + W, :].astype(o_ref.dtype)


def conv3x3_mbstd_lrelu(x, w9, bias, gmaps, *, activation="lrelu",
                        act_gain=SQRT2, clamp=None, compute_dtype=None):
    """Fused Conv2dLayer(3x3, up=down=1) with the MinibatchStd channel folded in.

    x:     [N, Cin, H, W] f32 (WITHOUT the mbstd channel)
    w9:    [9, Cin, Cout]  equalized-lr gain folded, tap-major
    gmaps: [ngroups, H*(W+2), Cout] f32 per-group response of the mbstd channel
           (sample n uses group n % ngroups; pass zeros when mbstd is disabled)
    returns [N, H, W, Cout] f32 (NHWC).
    """
    if compute_dtype is None:
        compute_dtype = DEFAULT_COMPUTE_DTYPE
    precision = _mm_precision(compute_dtype)
    N, Cin, H, W = x.shape
    Hp, Wp = H + 3, W + 2          # extra bottom pad row keeps every tap slice
    HWp = H * Wp                   # inside the VMEM block
    Cout = w9.shape[2]
    ngroups = gmaps.shape[0]
    assert gmaps.shape == (ngroups, HWp, Cout) and N % ngroups == 0

    w9 = w9.astype(compute_dtype)
    gmaps = gmaps.astype(jnp.float32)
    b2 = jnp.asarray(bias, jnp.float32).reshape(1, Cout)
    # Layout plumbing only (one transpose + pad, fused by XLA); no 9x inflation.
    xt = jnp.transpose(x.astype(jnp.float32), (0, 2, 3, 1))
    xf = jnp.pad(xt, ((0, 0), (1, 2), (1, 1), (0, 0))).reshape(N, Hp * Wp, Cin)

    # Split Cout when the per-step working set would not fit the VMEM budget.
    w_item = jnp.dtype(compute_dtype).itemsize
    tco = Cout

    def _need(t):
        return (2 * 9 * Cin * t * w_item + 2 * Hp * Wp * Cin * 4
                + 2 * HWp * t * 4 + 2 * H * W * t * 4 + 2 * t * 4)

    while tco % 256 == 0 and _need(tco) > _TILE_BUDGET_BYTES:
        tco //= 2
    n_co = Cout // tco

    kernel = functools.partial(
        _conv3x3_kernel, H=H, W=W, Wp=Wp, activation=activation,
        act_gain=float(act_gain), clamp=None if clamp is None else float(clamp),
        compute_dtype=compute_dtype, precision=precision)

    return pl.pallas_call(
        kernel,
        out_shape=jax.ShapeDtypeStruct((N, H, W, Cout), jnp.float32),
        grid_spec=pltpu.PrefetchScalarGridSpec(
            num_scalar_prefetch=0,
            grid=(N, n_co),
            in_specs=[
                pl.BlockSpec((1, Hp * Wp, Cin), lambda n, j: (n, 0, 0)),
                pl.BlockSpec((9, Cin, tco), lambda n, j: (0, 0, j)),
                pl.BlockSpec((1, HWp, tco), lambda n, j: (n % ngroups, 0, j)),
                pl.BlockSpec((1, tco), lambda n, j: (0, j)),
            ],
            out_specs=pl.BlockSpec((1, H, W, tco), lambda n, j: (n, 0, 0, j)),
        ),
        compiler_params=_compiler_params(("parallel", "parallel")),
    )(xf, w9, gmaps, b2)
    # TODO(synk): Conv2dLayer up/down resampling (upfirdn2d) is not implemented; the
    # DiscriminatorEpilogue only ever uses up=down=1.


# ---------------------------------------------------------------------------
# MinibatchStdLayer: per-group statistic only (channel is folded into the conv)
# ---------------------------------------------------------------------------

def _mbstd_group_kernel(x_ref, o_ref):
    x = x_ref[...]                                   # (G, ngroups, C*H*W)
    mu = jnp.mean(x, axis=0, keepdims=True)
    var = jnp.mean(jnp.square(x - mu), axis=0, keepdims=True)
    std = jnp.sqrt(var + 1e-8)                       # (1, ngroups, C*H*W)
    o_ref[...] = jnp.mean(std, axis=2)               # (1, ngroups)


def minibatch_std_group_stats(x, group_size):
    """Per-group MinibatchStd statistic (num_channels=1). Returns [ngroups] f32;
    sample n uses group n % ngroups (matching torch's reshape/repeat semantics)."""
    N, C, H, W = x.shape
    G = N if group_size is None else min(int(group_size), N)
    assert N % G == 0
    ngroups = N // G
    xg = x.astype(jnp.float32).reshape(G, ngroups, C * H * W)   # free reshape
    stat = pl.pallas_call(
        _mbstd_group_kernel,
        out_shape=jax.ShapeDtypeStruct((1, ngroups), jnp.float32),
        compiler_params=_compiler_params(),
    )(xg)
    return stat.reshape(ngroups)
    # TODO(synk): mbstd num_channels > 1 (per-channel-group statistics) not implemented.


# ---------------------------------------------------------------------------
# Final FC + cmap projection fused in one kernel
# ---------------------------------------------------------------------------

def _out_cmap_kernel(x_ref, wt_ref, b_ref, c_ref, o_ref, *, scale,
                     compute_dtype, precision):
    y = jnp.dot(x_ref[...].astype(compute_dtype), wt_ref[...].astype(compute_dtype),
                preferred_element_type=jnp.float32, precision=precision)
    y = y + b_ref[...]
    o_ref[...] = (jnp.sum(y * c_ref[...], axis=1, keepdims=True)
                  * scale).astype(o_ref.dtype)


def out_fc_cmap_project(x, w_t, bias, cmap, *, scale, compute_dtype=None):
    if compute_dtype is None:
        compute_dtype = DEFAULT_COMPUTE_DTYPE
    N, _ = x.shape
    D = w_t.shape[1]
    kernel = functools.partial(_out_cmap_kernel, scale=float(scale),
                               compute_dtype=compute_dtype,
                               precision=_mm_precision(compute_dtype))
    return pl.pallas_call(
        kernel, out_shape=jax.ShapeDtypeStruct((N, 1), jnp.float32),
        compiler_params=_compiler_params(),
    )(x.astype(jnp.float32), w_t.astype(compute_dtype),
      jnp.asarray(bias, jnp.float32).reshape(1, D), cmap.astype(jnp.float32))


# ---------------------------------------------------------------------------
# DiscriminatorEpilogue parameters + forward
# ---------------------------------------------------------------------------

def init_epilogue_params(key, *, in_channels, cmap_dim, resolution, img_channels,
                         architecture="resnet", mbstd_num_channels=1):
    """PyTorch-equivalent random init (randn weights, zero biases, bias_init=0)."""
    assert architecture in ("orig", "skip", "resnet")
    C = in_channels
    out_dim = cmap_dim if cmap_dim > 0 else 1
    cin_conv = C + mbstd_num_channels
    ks = jax.random.split(key, 4)
    p = {
        "conv_w": jax.random.normal(ks[0], (C, cin_conv, 3, 3), jnp.float32),
        "conv_b": jnp.zeros((C,), jnp.float32),
        "fc_w": jax.random.normal(ks[1], (C, C * resolution * resolution), jnp.float32),
        "fc_b": jnp.zeros((C,), jnp.float32),
        "out_w": jax.random.normal(ks[2], (out_dim, C), jnp.float32),
        "out_b": jnp.zeros((out_dim,), jnp.float32),
    }
    if architecture == "skip":
        p["fromrgb_w"] = jax.random.normal(ks[3], (C, img_channels, 1, 1), jnp.float32)
        p["fromrgb_b"] = jnp.zeros((C,), jnp.float32)
    return p


def _tap_mask_matrix(H, W):
    """M[r, t] = 1 iff conv tap t of flat output position r falls on a real
    (non-padding) pixel, using the same padded flat-row layout as the conv kernel."""
    Hp, Wp = H + 3, W + 2
    mask = np.zeros((Hp, Wp), np.float32)
    mask[1:H + 1, 1:W + 1] = 1.0
    flat = mask.reshape(-1)
    HWp = H * Wp
    M = np.zeros((HWp, 9), np.float32)
    for t in range(9):
        off = (t // 3) * Wp + (t % 3)
        M[:, t] = flat[off:off + HWp]
    return M


def prepare_epilogue_params(raw, *, in_channels, resolution, mbstd_num_channels=1,
                            architecture="resnet", compute_dtype=None):
    """One-time parameter prep: fold equalized-LR gains, transpose to [in,out],
    permute FC columns CHW->HWC (conv output stays NHWC), precompute the
    minibatch-std channel's conv response, cast weights to the compute dtype."""
    if compute_dtype is None:
        compute_dtype = DEFAULT_COMPUTE_DTYPE
    C, R = in_channels, resolution
    cin_tot = C + mbstd_num_channels
    prep = {}

    # Conv 3x3: tap-major weights + precomputed mbstd-channel response map.
    wg = 1.0 / float(np.sqrt(cin_tot * 9))
    w = raw["conv_w"] * wg                                    # [C, cin_tot, 3, 3]
    w_taps = jnp.transpose(w, (2, 3, 1, 0)).reshape(9, cin_tot, C)
    prep["conv_w9"] = w_taps[:, :C, :].astype(compute_dtype)
    if mbstd_num_channels == 1:
        w_stat = w_taps[:, C, :]                              # [9, C]
        w_stat = w_stat.astype(compute_dtype).astype(jnp.float32)
        prep["conv_statmap"] = jnp.asarray(_tap_mask_matrix(R, R)) @ w_stat
    elif mbstd_num_channels == 0:
        prep["conv_statmap"] = jnp.zeros((R * (R + 2), C), jnp.float32)
    else:
        # TODO(synk): mbstd num_channels > 1 not supported.
        raise NotImplementedError("mbstd_num_channels > 1 not supported")
    prep["conv_b"] = jnp.asarray(raw["conv_b"], jnp.float32)

    # FC (C*R*R -> C): permute input columns CHW -> HWC, fold gain, transpose.
    wg = 1.0 / float(np.sqrt(C * R * R))
    fw = (raw["fc_w"] * wg).reshape(C, C, R, R).transpose(0, 2, 3, 1)
    prep["fc_w_t"] = fw.reshape(C, R * R * C).T.astype(compute_dtype)
    prep["fc_b"] = jnp.asarray(raw["fc_b"], jnp.float32)

    # Out FC.
    wg = 1.0 / float(np.sqrt(C))
    prep["out_w_t"] = (raw["out_w"] * wg).T.astype(compute_dtype)
    prep["out_b"] = jnp.asarray(raw["out_b"], jnp.float32)

    if architecture == "skip":
        img_channels = raw["fromrgb_w"].shape[1]
        wg = 1.0 / float(np.sqrt(img_channels))
        prep["fromrgb_w_t"] = ((raw["fromrgb_w"] * wg).reshape(C, img_channels)
                               .T.astype(compute_dtype))
        prep["fromrgb_b"] = jnp.asarray(raw["fromrgb_b"], jnp.float32)
    return prep


def discriminator_epilogue_forward(prep, x, img=None, cmap=None, *, cmap_dim,
                                   architecture="resnet", conv_clamp=None,
                                   mbstd_group_size=4, mbstd_num_channels=1,
                                   use_mbstd_in_D=True, compute_dtype=None):
    """DiscriminatorEpilogue.forward (fp32 module semantics, bf16 MXU by default)."""
    if compute_dtype is None:
        compute_dtype = DEFAULT_COMPUTE_DTYPE
    x = x.astype(jnp.float32)
    N, C, H, W = x.shape

    if architecture == "skip":
        imgf = jnp.transpose(img.astype(jnp.float32), (0, 2, 3, 1)).reshape(N * H * W, -1)
        y = matmul_bias_act(imgf, prep["fromrgb_w_t"], prep["fromrgb_b"],
                            activation="lrelu", act_gain=SQRT2,
                            compute_dtype=compute_dtype)
        x = x + jnp.transpose(y.reshape(N, H, W, C), (0, 3, 1, 2))

    # MinibatchStdLayer: only the per-group statistic is computed; the constant
    # channel's conv response is folded into the conv kernel (no concat / tile).
    HWp = H * (W + 2)
    if mbstd_num_channels == 1 and use_mbstd_in_D:
        stats = minibatch_std_group_stats(x, mbstd_group_size)            # [ngroups]
        gmaps = stats[:, None, None] * prep["conv_statmap"][None]         # [ng,HWp,C]
    else:
        # use_mbstd_in_D=False appends an all-zero channel -> zero contribution.
        gmaps = jnp.zeros((1, HWp, C), jnp.float32)

    y = conv3x3_mbstd_lrelu(x, prep["conv_w9"], prep["conv_b"], gmaps,
                            activation="lrelu", act_gain=SQRT2, clamp=conv_clamp,
                            compute_dtype=compute_dtype)                  # [N,H,W,C]

    h = matmul_bias_act(y.reshape(N, H * W * C), prep["fc_w_t"], prep["fc_b"],
                        activation="lrelu", act_gain=SQRT2,
                        compute_dtype=compute_dtype)

    if cmap_dim > 0:
        return out_fc_cmap_project(h, prep["out_w_t"], prep["out_b"],
                                   cmap.astype(jnp.float32),
                                   scale=1.0 / float(np.sqrt(cmap_dim)),
                                   compute_dtype=compute_dtype)
    return matmul_bias_act(h, prep["out_w_t"], prep["out_b"], activation="linear",
                           compute_dtype=compute_dtype)


# ---------------------------------------------------------------------------
# Pure-JAX reference (mirrors the PyTorch code path) for verification
# ---------------------------------------------------------------------------

def epilogue_reference(raw, x, img, cmap, *, cmap_dim, architecture="resnet",
                       conv_clamp=None, mbstd_group_size=4, mbstd_num_channels=1,
                       use_mbstd_in_D=True, compute_dtype=jnp.bfloat16):
    cd = compute_dtype
    prec = _mm_precision(cd)

    def mm(a, b):
        return jnp.dot(a.astype(cd), b.astype(cd),
                       preferred_element_type=jnp.float32, precision=prec)

    def conv(a, w, pad):
        return lax.conv_general_dilated(
            a.astype(cd), w.astype(cd), (1, 1), pad,
            dimension_numbers=("NCHW", "OIHW", "NCHW"),
            preferred_element_type=jnp.float32, precision=prec)

    def lrelu_gain(v, clamp=None):
        v = jnp.where(v >= 0, v, 0.2 * v) * SQRT2
        if clamp is not None:
            v = jnp.clip(v, -clamp, clamp)
        return v

    x = x.astype(jnp.float32)
    N, C, H, W = x.shape
    if architecture == "skip":
        wg = 1.0 / float(np.sqrt(raw["fromrgb_w"].shape[1]))
        y = conv(img.astype(jnp.float32), raw["fromrgb_w"] * wg, "VALID")
        x = x + lrelu_gain(y + raw["fromrgb_b"].reshape(1, -1, 1, 1))
    if use_mbstd_in_D and mbstd_num_channels > 0:
        G = min(mbstd_group_size, N) if mbstd_group_size is not None else N
        F = mbstd_num_channels
        c = C // F
        y = x.reshape(G, -1, F, c, H, W)
        y = y - y.mean(axis=0)
        y = jnp.mean(jnp.square(y), axis=0)
        y = jnp.sqrt(y + 1e-8)
        y = y.mean(axis=(2, 3, 4))
        y = y.reshape(-1, F, 1, 1)
        y = jnp.tile(y, (G, 1, H, W))
        x = jnp.concatenate([x, y], axis=1)
    elif not use_mbstd_in_D:
        x = jnp.concatenate([x, jnp.zeros((N, 1, H, W), x.dtype)], axis=1)
    cin = x.shape[1]
    wg = 1.0 / float(np.sqrt(cin * 9))
    y = conv(x, raw["conv_w"] * wg, ((1, 1), (1, 1)))
    x = lrelu_gain(y + raw["conv_b"].reshape(1, -1, 1, 1), conv_clamp)
    wg = 1.0 / float(np.sqrt(raw["fc_w"].shape[1]))
    x = lrelu_gain(mm(x.reshape(N, -1), (raw["fc_w"] * wg).T) + raw["fc_b"])
    wg = 1.0 / float(np.sqrt(raw["out_w"].shape[1]))
    x = mm(x, (raw["out_w"] * wg).T) + raw["out_b"]
    if cmap_dim > 0:
        x = jnp.sum(x * cmap.astype(jnp.float32), axis=1, keepdims=True) \
            * (1.0 / float(np.sqrt(cmap_dim)))
    return x


# ---------------------------------------------------------------------------
# Demo / self-test
# ---------------------------------------------------------------------------

if __name__ == "__main__":
    key = jax.random.PRNGKey(0)
    k_param, k_x, k_cmap, k_fc_x, k_fc_w, k_big_x, k_big_w = jax.random.split(key, 7)

    in_channels = 32
    cmap_dim = 16
    resolution = 8
    img_channels = 3
    batch = 8
    mbstd_group_size = 4
    mbstd_num_channels = 1
    architecture = "resnet"

    raw = init_epilogue_params(k_param, in_channels=in_channels, cmap_dim=cmap_dim,
                               resolution=resolution, img_channels=img_channels,
                               architecture=architecture,
                               mbstd_num_channels=mbstd_num_channels)
    x = jax.random.normal(k_x, (batch, in_channels, resolution, resolution), jnp.float32)
    cmap = jax.random.normal(k_cmap, (batch, cmap_dim), jnp.float32)

    # ---- full-fidelity f32 path: validates kernel structure tightly ------------
    prep32 = prepare_epilogue_params(raw, in_channels=in_channels, resolution=resolution,
                                     mbstd_num_channels=mbstd_num_channels,
                                     architecture=architecture, compute_dtype=jnp.float32)
    out32 = jax.block_until_ready(discriminator_epilogue_forward(
        prep32, x, None, cmap, cmap_dim=cmap_dim, architecture=architecture,
        mbstd_group_size=mbstd_group_size, mbstd_num_channels=mbstd_num_channels,
        compute_dtype=jnp.float32))
    ref32 = epilogue_reference(raw, x, None, cmap, cmap_dim=cmap_dim,
                               architecture=architecture,
                               mbstd_group_size=mbstd_group_size,
                               mbstd_num_channels=mbstd_num_channels,
                               compute_dtype=jnp.float32)
    np.testing.assert_allclose(np.asarray(out32), np.asarray(ref32), rtol=1e-4, atol=1e-4)

    # ---- default fast path: bf16 MXU inputs, f32 accumulation ------------------
    prep = prepare_epilogue_params(raw, in_channels=in_channels, resolution=resolution,
                                   mbstd_num_channels=mbstd_num_channels,
                                   architecture=architecture)
    out = jax.block_until_ready(discriminator_epilogue_forward(
        prep, x, None, cmap, cmap_dim=cmap_dim, architecture=architecture,
        mbstd_group_size=mbstd_group_size, mbstd_num_channels=mbstd_num_channels))
    ref = epilogue_reference(raw, x, None, cmap, cmap_dim=cmap_dim,
                             architecture=architecture,
                             mbstd_group_size=mbstd_group_size,
                             mbstd_num_channels=mbstd_num_channels,
                             compute_dtype=jnp.bfloat16)
    np.testing.assert_allclose(np.asarray(out), np.asarray(ref), rtol=5e-3, atol=5e-3)

    # ---- Standalone FullyConnectedLayer (nontrivial lr_multiplier & bias_init) --
    lr_multiplier, bias_init = 0.01, 0.1
    xf = jax.random.normal(k_fc_x, (16, 256), jnp.float32)
    wf = jax.random.normal(k_fc_w, (128, 256), jnp.float32) / lr_multiplier
    bf = jnp.full((128,), np.float32(bias_init))
    w_t = (wf * float(lr_multiplier / np.sqrt(256))).T      # prep-time fold+transpose
    b_eff = bf * float(lr_multiplier)
    y = jax.block_until_ready(
        matmul_bias_act(xf, w_t, b_eff, activation="lrelu", act_gain=SQRT2))
    yr = jnp.dot(xf.astype(jnp.bfloat16), w_t.astype(jnp.bfloat16),
                 preferred_element_type=jnp.float32) + b_eff
    yr = jnp.where(yr >= 0, yr, 0.2 * yr) * SQRT2
    np.testing.assert_allclose(np.asarray(y), np.asarray(yr), rtol=2e-3, atol=2e-3)

    # no-bias linear path (bias operand dropped entirely)
    y2 = jax.block_until_ready(matmul_bias_act(xf, w_t, None, activation="linear"))
    y2r = jnp.dot(xf.astype(jnp.bfloat16), w_t.astype(jnp.bfloat16),
                  preferred_element_type=jnp.float32)
    np.testing.assert_allclose(np.asarray(y2), np.asarray(y2r), rtol=2e-3, atol=2e-3)

    # ---- Tiled path at a realistic FC size (K-collapsed and K-split kernels) ----
    M, K, N = 256, 2048, 512
    xb = jax.random.normal(k_big_x, (M, K), jnp.float32)
    wbt = jax.random.normal(k_big_w, (K, N), jnp.float32) / np.float32(np.sqrt(K))
    bb = jnp.full((N,), 0.05, jnp.float32)
    ref_big = jnp.dot(xb.astype(jnp.bfloat16), wbt.astype(jnp.bfloat16),
                      preferred_element_type=jnp.float32) + bb
    ref_big = jnp.where(ref_big >= 0, ref_big, 0.2 * ref_big) * SQRT2
    y_big = jax.block_until_ready(
        matmul_bias_act(xb, wbt, bb, activation="lrelu", act_gain=SQRT2,
                        tm=128, tn=256))                              # K collapsed
    np.testing.assert_allclose(np.asarray(y_big), np.asarray(ref_big), rtol=2e-3, atol=2e-3)
    y_big2 = jax.block_until_ready(
        matmul_bias_act(xb, wbt, bb, activation="lrelu", act_gain=SQRT2,
                        tm=128, tn=256, tk=512))                      # K split
    np.testing.assert_allclose(np.asarray(y_big2), np.asarray(ref_big), rtol=2e-3, atol=2e-3)

    print("KERNEL_OK")
</pallas_src>

<mosaic_0001>
module attributes {stable_mosaic.version = 11 : i64} {
  func.func @_mbstd_group_kernel(%arg0: memref<4x2x2048xf32, #tpu.memory_space<vmem>>, %arg1: memref<1x2xf32, #tpu.memory_space<vmem>>) attributes {dimension_semantics = [], scalar_prefetch = 0 : i64, scratch_operands = 0 : i64, tpu.core_type = #tpu.core_type<tc>} {
    %c0 = arith.constant 0 : index
    %c0_0 = arith.constant 0 : index
    %c0_1 = arith.constant 0 : index
    %0 = vector.load %arg0[%c0, %c0_0, %c0_1] : memref<4x2x2048xf32, #tpu.memory_space<vmem>>, vector<4x2x2048xf32>
    %cst = arith.constant dense<0.000000e+00> : vector<2x2048xf32>
    %1 = vector.multi_reduction <add>, %0, %cst [0] : vector<4x2x2048xf32> to vector<2x2048xf32>
    %2 = vector.shape_cast %1 : vector<2x2048xf32> to vector<1x2x2048xf32>
    %cst_2 = arith.constant 4.000000e+00 : f32
    %3 = vector.broadcast %cst_2 : f32 to vector<1x2x2048xf32>
    %4 = arith.divf %2, %3 : vector<1x2x2048xf32>
    %5 = vector.broadcast %4 : vector<1x2x2048xf32> to vector<4x2x2048xf32>
    %6 = arith.subf %0, %5 : vector<4x2x2048xf32>
    %7 = arith.mulf %6, %6 : vector<4x2x2048xf32>
    %cst_3 = arith.constant dense<0.000000e+00> : vector<2x2048xf32>
    %8 = vector.multi_reduction <add>, %7, %cst_3 [0] : vector<4x2x2048xf32> to vector<2x2048xf32>
    %9 = vector.shape_cast %8 : vector<2x2048xf32> to vector<1x2x2048xf32>
    %cst_4 = arith.constant 4.000000e+00 : f32
    %10 = vector.broadcast %cst_4 : f32 to vector<1x2x2048xf32>
    %11 = arith.divf %9, %10 : vector<1x2x2048xf32>
    %cst_5 = arith.constant 9.99999993E-9 : f32
    %12 = vector.broadcast %cst_5 : f32 to vector<1x2x2048xf32>
    %13 = arith.addf %11, %12 : vector<1x2x2048xf32>
    %14 = math.sqrt %13 : vector<1x2x2048xf32>
    %cst_6 = arith.constant dense<0.000000e+00> : vector<1x2xf32>
    %15 = vector.multi_reduction <add>, %14, %cst_6 [2] : vector<1x2x2048xf32> to vector<1x2xf32>
    %cst_7 = arith.constant 2.048000e+03 : f32
    %16 = vector.broadcast %cst_7 : f32 to vector<1x2xf32>
    %17 = arith.divf %15, %16 : vector<1x2xf32>
    %c0_8 = arith.constant 0 : index
    %c0_9 = arith.constant 0 : index
    %18 = vector.load %arg1[%c0_8, %c0_9] : memref<1x2xf32, #tpu.memory_space<vmem>>, vector<1x2xf32>
    tpu.vector_store %arg1[%c0_8, %c0_9], %17 {strides = array<i32>} : memref<1x2xf32, #tpu.memory_space<vmem>>, vector<1x2xf32>,
    return
  }
}

</mosaic_0001>

<llo_original>
// kernel: tpu_custom_call.1
$region0: #{tpu_custom_call.1}
  #allocation0 [shape = 'u32[]', space=smem, size = 0x4, offset = 0x4, fixed_abs, tag = 'smem constant byte address 0x4 - core index']
  #allocation1 [shape = 'u32[72,128]{1,0:T(1,128)}', space=vmem, size = 0x9000, scoped, tag = 'internal scratch']
  %s0 = inlined_call_operand.hbm [shape: f32[4,2,2048], index: 0, kind: input, shape index: {}]
  %s1 = inlined_call_operand.hbm [shape: f32[1,2], index: 1, kind: output, shape index: {}]
  %s2 = sld [smem:[#allocation0]]
  $region18: #{tpu_custom_call.1} parent=0
    _
  %s4 = ssub.s32 1, %s2
  %s5 = scalar_select 0, %s4, %s2
  $region1: #{tpu_custom_call.1} parent=0
    #allocation2 [shape = 'u8[65536]{0}', space=vmem, size = 0x10000, scoped, tag = 'input window, operand 0, single buffered']
    #allocation3 [shape = 's32[1]{0}', space=sflag, size = 0x4, scoped, tag = 'scoped memory for tpu_custom_call.1']
    #allocation4 [shape = 's32[1]{0}', space=sflag, size = 0x4, scoped, tag = 'scoped memory for tpu_custom_call.1']
    #allocation5 [shape = 'u8[512]{0}', space=vmem, size = 0x400, scoped, tag = 'output window, operand 0, single buffered']
    %6 = vsyncpa [#allocation3], 0
    %7 = vsyncpa [#allocation4], 0
    // Predicated region
    $region2: #{tpu_custom_call.1} parent=1 // pred_check
      _
    $region3: #{tpu_custom_call.1} parent=1 // pred_check_branch
      %9 = sbr.rel (0) target = $region5
    $region4: #{tpu_custom_call.1} parent=1 // pred_region
      %11 = vsyncadd [#allocation3], 0
      %s12 = sshll.u32 %s0, 4
      %s13 = int_to_ptr.hbm [resolvable:$true] %s12
      %s14 = sshll.u32 [#allocation2], 4
      %s15 = int_to_ptr.vmem [resolvable:$true] %s14
      %20 = dma.hbm_to_vmem [thread:$0]  %s13, 2048, %s15, [#allocation3], 512, 512, 32
    $region5: #{tpu_custom_call.1} parent=1 // pred_fallthru
      _
    // Predicated region
    $region6: #{tpu_custom_call.1} parent=1 // pred_check
      _
    $region7: #{tpu_custom_call.1} parent=1 // pred_check_branch
      %22 = sbr.rel (0) target = $region9
    $region8: #{tpu_custom_call.1} parent=1 // pred_region
      %24 = dma.done [#allocation3], 2048
    $region9: #{tpu_custom_call.1} parent=1 // pred_fallthru
      _
    %v25 = vld [vmem:[#allocation2] sm:$0xff]
    %v26 = vld [vmem:[#allocation2 + $0x8] sm:$0xff]
    %v27 = vld [vmem:[#allocation2 + $0x10] sm:$0xff]
    %v28 = vld [vmem:[#allocation2 + $0x18] sm:$0xff]
    %v29 = vld [vmem:[#allocation2 + $0x20] sm:$0xff]
    %v30 = vld [vmem:[#allocation2 + $0x28] sm:$0xff]
    %v31 = vld [vmem:[#allocation2 + $0x30] sm:$0xff]
    %v32 = vld [vmem:[#allocation2 + $0x38] sm:$0xff]
    %v33 = vld [vmem:[#allocation2 + $0x40] sm:$0xff]
    %v34 = vld [vmem:[#allocation2 + $0x48] sm:$0xff]
    %v35 = vld [vmem:[#allocation2 + $0x50] sm:$0xff]
    %v36 = vld [vmem:[#allocation2 + $0x58] sm:$0xff]
    %v37 = vld [vmem:[#allocation2 + $0x60] sm:$0xff]
    %v38 = vld [vmem:[#allocation2 + $0x68] sm:$0xff]
    %v39 = vld [vmem:[#allocation2 + $0x70] sm:$0xff]
    %v40 = vld [vmem:[#allocation2 + $0x78] sm:$0xff]
    %57 = vst [vmem:[#allocation1] ss:$4 sm:$0xff] %v25
    %s58 = scalar_lea.vmem [#allocation1], 32
    %59 = vst [vmem:[%s58] ss:$4 sm:$0xff] %v26
    %v60 = vld.sshfl [vmem:[#allocation1] sm:$0xff pattern:$0x73625140]
    %v61 = vld.sshfl [vmem:[#allocation1 + $0x8] sm:$0xff pattern:$0x73625140]
    %v62 = vld.sshfl [vmem:[#allocation1 + $0x10] sm:$0xff pattern:$0x73625140]
    %v63 = vld.sshfl [vmem:[#allocation1 + $0x18] sm:$0xff pattern:$0x73625140]
    %v64 = vld.sshfl [vmem:[#allocation1 + $0x20] sm:$0xff pattern:$0x73625140]
    %v65 = vld.sshfl [vmem:[#allocation1 + $0x28] sm:$0xff pattern:$0x73625140]
    %v66 = vld.sshfl [vmem:[#allocation1 + $0x30] sm:$0xff pattern:$0x73625140]
    %v67 = vld.sshfl [vmem:[#allocation1 + $0x38] sm:$0xff pattern:$0x73625140]
    %68 = vst [vmem:[#allocation1] ss:$4 sm:$0xff] %v27
    %69 = vst [vmem:[%s58] ss:$4 sm:$0xff] %v28
    %v70 = vld.sshfl [vmem:[#allocation1] sm:$0xff pattern:$0x73625140]
    %v71 = vld.sshfl [vmem:[#allocation1 + $0x8] sm:$0xff pattern:$0x73625140]
    %v72 = vld.sshfl [vmem:[#allocation1 + $0x10] sm:$0xff pattern:$0x73625140]
    %v73 = vld.sshfl [vmem:[#allocation1 + $0x18] sm:$0xff pattern:$0x73625140]
    %v74 = vld.sshfl [vmem:[#allocation1 + $0x20] sm:$0xff pattern:$0x73625140]
    %v75 = vld.sshfl [vmem:[#allocation1 + $0x28] sm:$0xff pattern:$0x73625140]
    %v76 = vld.sshfl [vmem:[#allocation1 + $0x30] sm:$0xff pattern:$0x73625140]
    %v77 = vld.sshfl [vmem:[#allocation1 + $0x38] sm:$0xff pattern:$0x73625140]
    %78 = vst [vmem:[#allocation1] ss:$4 sm:$0xff] %v29
    %79 = vst [vmem:[%s58] ss:$4 sm:$0xff] %v30
    %v80 = vld.sshfl [vmem:[#allocation1] sm:$0xff pattern:$0x73625140]
    %v81 = vld.sshfl [vmem:[#allocation1 + $0x8] sm:$0xff pattern:$0x73625140]
    %v82 = vld.sshfl [vmem:[#allocation1 + $0x10] sm:$0xff pattern:$0x73625140]
    %v83 = vld.sshfl [vmem:[#allocation1 + $0x18] sm:$0xff pattern:$0x73625140]
    %v84 = vld.sshfl [vmem:[#allocation1 + $0x20] sm:$0xff pattern:$0x73625140]
    %v85 = vld.sshfl [vmem:[#allocation1 + $0x28] sm:$0xff pattern:$0x73625140]
    %v86 = vld.sshfl [vmem:[#allocation1 + $0x30] sm:$0xff pattern:$0x73625140]
    %v87 = vld.sshfl [vmem:[#allocation1 + $0x38] sm:$0xff pattern:$0x73625140]
    %88 = vst [vmem:[#allocation1] ss:$4 sm:$0xff] %v31
    %89 = vst [vmem:[%s58] ss:$4 sm:$0xff] %v32
    %v90 = vld.sshfl [vmem:[#allocation1] sm:$0xff pattern:$0x73625140]
    %v91 = vld.sshfl [vmem:[#allocation1 + $0x8] sm:$0xff pattern:$0x73625140]
    %v92 = vld.sshfl [vmem:[#allocation1 + $0x10] sm:$0xff pattern:$0x73625140]
    %v93 = vld.sshfl [vmem:[#allocation1 + $0x18] sm:$0xff pattern:$0x73625140]
    %v94 = vld.sshfl [vmem:[#allocation1 + $0x20] sm:$0xff pattern:$0x73625140]
    %v95 = vld.sshfl [vmem:[#allocation1 + $0x28] sm:$0xff pattern:$0x73625140]
    %v96 = vld.sshfl [vmem:[#allocation1 + $0x30] sm:$0xff pattern:$0x73625140]
    %v97 = vld.sshfl [vmem:[#allocation1 + $0x38] sm:$0xff pattern:$0x73625140]
    %98 = vst [vmem:[#allocation1] ss:$4 sm:$0xff] %v33
    %99 = vst [vmem:[%s58] ss:$4 sm:$0xff] %v34
    %v100 = vld.sshfl [vmem:[#allocation1] sm:$0xff pattern:$0x73625140]
    %v101 = vld.sshfl [vmem:[#allocation1 + $0x8] sm:$0xff pattern:$0x73625140]
    %v102 = vld.sshfl [vmem:[#allocation1 + $0x10] sm:$0xff pattern:$0x73625140]
    %v103 = vld.sshfl [vmem:[#allocation1 + $0x18] sm:$0xff pattern:$0x73625140]
    %v104 = vld.sshfl [vmem:[#allocation1 + $0x20] sm:$0xff pattern:$0x73625140]
    %v105 = vld.sshfl [vmem:[#allocation1 + $0x28] sm:$0xff pattern:$0x73625140]
    %v106 = vld.sshfl [vmem:[#allocation1 + $0x30] sm:$0xff pattern:$0x73625140]
    %v107 = vld.sshfl [vmem:[#allocation1 + $0x38] sm:$0xff pattern:$0x73625140]
    %108 = vst [vmem:[#allocation1] ss:$4 sm:$0xff] %v35
    %109 = vst [vmem:[%s58] ss:$4 sm:$0xff] %v36
    %v110 = vld.sshfl [vmem:[#allocation1] sm:$0xff pattern:$0x73625140]
    %v111 = vld.sshfl [vmem:[#allocation1 + $0x8] sm:$0xff pattern:$0x73625140]
    %v112 = vld.sshfl [vmem:[#allocation1 + $0x10] sm:$0xff pattern:$0x73625140]
    %v113 = vld.sshfl [vmem:[#allocation1 + $0x18] sm:$0xff pattern:$0x73625140]
    %v114 = vld.sshfl [vmem:[#allocation1 + $0x20] sm:$0xff pattern:$0x73625140]
    %v115 = vld.sshfl [vmem:[#allocation1 + $0x28] sm:$0xff pattern:$0x73625140]
    %v116 = vld.sshfl [vmem:[#allocation1 + $0x30] sm:$0xff pattern:$0x73625140]
    %v117 = vld.sshfl [vmem:[#allocation1 + $0x38] sm:$0xff pattern:$0x73625140]
    %118 = vst [vmem:[#allocation1] ss:$4 sm:$0xff] %v37
    %119 = vst [vmem:[%s58] ss:$4 sm:$0xff] %v38
    %v120 = vld.sshfl [vmem:[#allocation1] sm:$0xff pattern:$0x73625140]
    %v121 = vld.sshfl [vmem:[#allocation1 + $0x8] sm:$0xff pattern:$0x73625140]
    %v122 = vld.sshfl [vmem:[#allocation1 + $0x10] sm:$0xff pattern:$0x73625140]
    %v123 = vld.sshfl [vmem:[#allocation1 + $0x18] sm:$0xff pattern:$0x73625140]
    %v124 = vld.sshfl [vmem:[#allocation1 + $0x20] sm:$0xff pattern:$0x73625140]
    %v125 = vld.sshfl [vmem:[#allocation1 + $0x28] sm:$0xff pattern:$0x73625140]
    %v126 = vld.sshfl [vmem:[#allocation1 + $0x30] sm:$0xff pattern:$0x73625140]
    %v127 = vld.sshfl [vmem:[#allocation1 + $0x38] sm:$0xff pattern:$0x73625140]
    %128 = vst [vmem:[#allocation1] ss:$4 sm:$0xff] %v39
    %129 = vst [vmem:[%s58] ss:$4 sm:$0xff] %v40
    %v130 = vld.sshfl [vmem:[#allocation1] sm:$0xff pattern:$0x73625140]
    %v131 = vld.sshfl [vmem:[#allocation1 + $0x8] sm:$0xff pattern:$0x73625140]
    %v132 = vld.sshfl [vmem:[#allocation1 + $0x10] sm:$0xff pattern:$0x73625140]
    %v133 = vld.sshfl [vmem:[#allocation1 + $0x18] sm:$0xff pattern:$0x73625140]
    %v134 = vld.sshfl [vmem:[#allocation1 + $0x20] sm:$0xff pattern:$0x73625140]
    %v135 = vld.sshfl [vmem:[#allocation1 + $0x28] sm:$0xff pattern:$0x73625140]
    %v136 = vld.sshfl [vmem:[#allocation1 + $0x30] sm:$0xff pattern:$0x73625140]
    %v137 = vld.sshfl [vmem:[#allocation1 + $0x38] sm:$0xff pattern:$0x73625140]
    %vm202 = vcmask 1041408
    %v203 = vsel %vm202, %v60, 0.0
    %v204 = vsel %vm202, %v80, 0.0
    %v205 = vadd.f32 %v203, %v204
    %v206 = vsel %vm202, %v100, 0.0
    %v207 = vadd.f32 %v205, %v206
    %v208 = vsel %vm202, %v120, 0.0
    %v209 = vadd.f32 %v207, %v208
    %v210 = vsel %vm202, %v61, 0.0
    %v211 = vsel %vm202, %v81, 0.0
    %v212 = vadd.f32 %v210, %v211
    %v213 = vsel %vm202, %v101, 0.0
    %v214 = vadd.f32 %v212, %v213
    %v215 = vsel %vm202, %v121, 0.0
    %v216 = vadd.f32 %v214, %v215
    %v217 = vsel %vm202, %v62, 0.0
    %v218 = vsel %vm202, %v82, 0.0
    %v219 = vadd.f32 %v217, %v218
    %v220 = vsel %vm202, %v102, 0.0
    %v221 = vadd.f32 %v219, %v220
    %v222 = vsel %vm202, %v122, 0.0
    %v223 = vadd.f32 %v221, %v222
    %v224 = vsel %vm202, %v63, 0.0
    %v225 = vsel %vm202, %v83, 0.0
    %v226 = vadd.f32 %v224, %v225
    %v227 = vsel %vm202, %v103, 0.0
    %v228 = vadd.f32 %v226, %v227
    %v229 = vsel %vm202, %v123, 0.0
    %v230 = vadd.f32 %v228, %v229
    %v231 = vsel %vm202, %v64, 0.0
    %v232 = vsel %vm202, %v84, 0.0
    %v233 = vadd.f32 %v231, %v232
    %v234 = vsel %vm202, %v104, 0.0
    %v235 = vadd.f32 %v233, %v234
    %v236 = vsel %vm202, %v124, 0.0
    %v237 = vadd.f32 %v235, %v236
    %v238 = vsel %vm202, %v65, 0.0
    %v239 = vsel %vm202, %v85, 0.0
    %v240 = vadd.f32 %v238, %v239
    %v241 = vsel %vm202, %v105, 0.0
    %v242 = vadd.f32 %v240, %v241
    %v243 = vsel %vm202, %v125, 0.0
    %v244 = vadd.f32 %v242, %v243
    %v245 = vsel %vm202, %v66, 0.0
    %v246 = vsel %vm202, %v86, 0.0
    %v247 = vadd.f32 %v245, %v246
    %v248 = vsel %vm202, %v106, 0.0
    %v249 = vadd.f32 %v247, %v248
    %v250 = vsel %vm202, %v126, 0.0
    %v251 = vadd.f32 %v249, %v250
    %v252 = vsel %vm202, %v67, 0.0
    %v253 = vsel %vm202, %v87, 0.0
    %v254 = vadd.f32 %v252, %v253
    %v255 = vsel %vm202, %v107, 0.0
    %v256 = vadd.f32 %v254, %v255
    %v257 = vsel %vm202, %v127, 0.0
    %v258 = vadd.f32 %v256, %v257
    %v259 = vsel %vm202, %v70, 0.0
    %v260 = vsel %vm202, %v90, 0.0
    %v261 = vadd.f32 %v259, %v260
    %v262 = vsel %vm202, %v110, 0.0
    %v263 = vadd.f32 %v261, %v262
    %v264 = vsel %vm202, %v130, 0.0
    %v265 = vadd.f32 %v263, %v264
    %v266 = vsel %vm202, %v71, 0.0
    %v267 = vsel %vm202, %v91, 0.0
    %v268 = vadd.f32 %v266, %v267
    %v269 = vsel %vm202, %v111, 0.0
    %v270 = vadd.f32 %v268, %v269
    %v271 = vsel %vm202, %v131, 0.0
    %v272 = vadd.f32 %v270, %v271
    %v273 = vsel %vm202, %v72, 0.0
    %v274 = vsel %vm202, %v92, 0.0
    %v275 = vadd.f32 %v273, %v274
    %v276 = vsel %vm202, %v112, 0.0
    %v277 = vadd.f32 %v275, %v276
    %v278 = vsel %vm202, %v132, 0.0
    %v279 = vadd.f32 %v277, %v278
    %v280 = vsel %vm202, %v73, 0.0
    %v281 = vsel %vm202, %v93, 0.0
    %v282 = vadd.f32 %v280, %v281
    %v283 = vsel %vm202, %v113, 0.0
    %v284 = vadd.f32 %v282, %v283
    %v285 = vsel %vm202, %v133, 0.0
    %v286 = vadd.f32 %v284, %v285
    %v287 = vsel %vm202, %v74, 0.0
    %v288 = vsel %vm202, %v94, 0.0
    %v289 = vadd.f32 %v287, %v288
    %v290 = vsel %vm202, %v114, 0.0
    %v291 = vadd.f32 %v289, %v290
    %v292 = vsel %vm202, %v134, 0.0
    %v293 = vadd.f32 %v291, %v292
    %v294 = vsel %vm202, %v75, 0.0
    %v295 = vsel %vm202, %v95, 0.0
    %v296 = vadd.f32 %v294, %v295
    %v297 = vsel %vm202, %v115, 0.0
    %v298 = vadd.f32 %v296, %v297
    %v299 = vsel %vm202, %v135, 0.0
    %v300 = vadd.f32 %v298, %v299
    %v301 = vsel %vm202, %v76, 0.0
    %v302 = vsel %vm202, %v96, 0.0
    %v303 = vadd.f32 %v301, %v302
    %v304 = vsel %vm202, %v116, 0.0
    %v305 = vadd.f32 %v303, %v304
    %v306 = vsel %vm202, %v136, 0.0
    %v307 = vadd.f32 %v305, %v306
    %v308 = vsel %vm202, %v77, 0.0
    %v309 = vsel %vm202, %v97, 0.0
    %v310 = vadd.f32 %v308, %v309
    %v311 = vsel %vm202, %v117, 0.0
    %v312 = vadd.f32 %v310, %v311
    %v313 = vsel %vm202, %v137, 0.0
    %v314 = vadd.f32 %v312, %v313
    %v315 = vrcp.pop 4.0
    %v316 = vmul.f32 4.0, %v315
    %v317 = vsub.f32 1.0, %v316
    %v318 = vmul.f32 %v315, %v317
    %v319 = vadd.f32 %v315, %v318
    %vm320 = vweird.f32 %v315
    %v321 = vsel %vm320, %v315, %v319
    %v322 = vmul.f32 %v209, %v321
    %v323 = vmul.f32 %v216, %v321
    %v324 = vmul.f32 %v223, %v321
    %v325 = vmul.f32 %v230, %v321
    %v326 = vmul.f32 %v237, %v321
    %v327 = vmul.f32 %v244, %v321
    %v328 = vmul.f32 %v251, %v321
    %v329 = vmul.f32 %v258, %v321
    %v330 = vmul.f32 %v265, %v321
    %v331 = vmul.f32 %v272, %v321
    %v332 = vmul.f32 %v279, %v321
    %v333 = vmul.f32 %v286, %v321
    %v334 = vmul.f32 %v293, %v321
    %v335 = vmul.f32 %v300, %v321
    %v336 = vmul.f32 %v307, %v321
    %v337 = vmul.f32 %v314, %v321
    %v354 = vrot.slane %v323, 6
    %v355 = vrot.slane %v324, 4
    %v356 = vrot.slane %v325, 2
    %v357 = vrot.slane %v327, 6
    %v358 = vrot.slane %v328, 4
    %v359 = vrot.slane %v329, 2
    %v360 = vrot.slane %v331, 6
    %v361 = vrot.slane %v332, 4
    %v362 = vrot.slane %v333, 2
    %v363 = vrot.slane %v335, 6
    %v364 = vrot.slane %v336, 4
    %v365 = vrot.slane %v337, 2
    %v366 = vsel %vm202, %v322, %v354
    %vm367 = vcmask 1045508
    %v368 = vsel %vm367, %v355, %v356
    %vm369 = vcmask 1043456
    %v370 = vsel %vm369, %v366, %v368
    %v371 = vsel %vm202, %v326, %v357
    %v372 = vsel %vm367, %v358, %v359
    %v373 = vsel %vm369, %v371, %v372
    %v374 = vsel %vm202, %v330, %v360
    %v375 = vsel %vm367, %v361, %v362
    %v376 = vsel %vm369, %v374, %v375
    %v377 = vsel %vm202, %v334, %v363
    %v378 = vsel %vm367, %v364, %v365
    %v379 = vsel %vm369, %v377, %v378
    %v384 = vsub.f32 %v25, %v370
    %v385 = vsub.f32 %v26, %v373
    %v386 = vsub.f32 %v27, %v376
    %v387 = vsub.f32 %v28, %v379
    %v388 = vsub.f32 %v29, %v370
    %v389 = vsub.f32 %v30, %v373
    %v390 = vsub.f32 %v31, %v376
    %v391 = vsub.f32 %v32, %v379
    %v392 = vsub.f32 %v33, %v370
    %v393 = vsub.f32 %v34, %v373
    %v394 = vsub.f32 %v35, %v376
    %v395 = vsub.f32 %v36, %v379
    %v396 = vsub.f32 %v37, %v370
    %v397 = vsub.f32 %v38, %v373
    %v398 = vsub.f32 %v39, %v376
    %v399 = vsub.f32 %v40, %v379
    %v400 = vmul.f32 %v384, %v384
    %v401 = vmul.f32 %v385, %v385
    %v402 = vmul.f32 %v386, %v386
    %v403 = vmul.f32 %v387, %v387
    %v404 = vmul.f32 %v388, %v388
    %v405 = vmul.f32 %v389, %v389
    %v406 = vmul.f32 %v390, %v390
    %v407 = vmul.f32 %v391, %v391
    %v408 = vmul.f32 %v392, %v392
    %v409 = vmul.f32 %v393, %v393
    %v410 = vmul.f32 %v394, %v394
    %v411 = vmul.f32 %v395, %v395
    %v412 = vmul.f32 %v396, %v396
    %v413 = vmul.f32 %v397, %v397
    %v414 = vmul.f32 %v398, %v398
    %v415 = vmul.f32 %v399, %v399
    %432 = vst [vmem:[#allocation1] ss:$4 sm:$0xff] %v400
    %s433 = scalar_lea.vmem [#allocation1], 32
    %434 = vst [vmem:[%s433] ss:$4 sm:$0xff] %v401
    %v435 = vld.sshfl [vmem:[#allocation1] sm:$0xff pattern:$0x73625140]
    %v436 = vld.sshfl [vmem:[#allocation1 + $0x8] sm:$0xff pattern:$0x73625140]
    %v437 = vld.sshfl [vmem:[#allocation1 + $0x10] sm:$0xff pattern:$0x73625140]
    %v438 = vld.sshfl [vmem:[#allocation1 + $0x18] sm:$0xff pattern:$0x73625140]
    %v439 = vld.sshfl [vmem:[#allocation1 + $0x20] sm:$0xff pattern:$0x73625140]
    %v440 = vld.sshfl [vmem:[#allocation1 + $0x28] sm:$0xff pattern:$0x73625140]
    %v441 = vld.sshfl [vmem:[#allocation1 + $0x30] sm:$0xff pattern:$0x73625140]
    %v442 = vld.sshfl [vmem:[#allocation1 + $0x38] sm:$0xff pattern:$0x73625140]
    %443 = vst [vmem:[#allocation1] ss:$4 sm:$0xff] %v402
    %444 = vst [vmem:[%s433] ss:$4 sm:$0xff] %v403
    %v445 = vld.sshfl [vmem:[#allocation1] sm:$0xff pattern:$0x73625140]
    %v446 = vld.sshfl [vmem:[#allocation1 + $0x8] sm:$0xff pattern:$0x73625140]
    %v447 = vld.sshfl [vmem:[#allocation1 + $0x10] sm:$0xff pattern:$0x73625140]
    %v448 = vld.sshfl [vmem:[#allocation1 + $0x18] sm:$0xff pattern:$0x73625140]
    %v449 = vld.sshfl [vmem:[#allocation1 + $0x20] sm:$0xff pattern:$0x73625140]
    %v450 = vld.sshfl [vmem:[#allocation1 + $0x28] sm:$0xff pattern:$0x73625140]
    %v451 = vld.sshfl [vmem:[#allocation1 + $0x30] sm:$0xff pattern:$0x73625140]
    %v452 = vld.sshfl [vmem:[#allocation1 + $0x38] sm:$0xff pattern:$0x73625140]
    %453 = vst [vmem:[#allocation1] ss:$4 sm:$0xff] %v404
    %454 = vst [vmem:[%s433] ss:$4 sm:$0xff] %v405
    %v455 = vld.sshfl [vmem:[#allocation1] sm:$0xff pattern:$0x73625140]
    %v456 = vld.sshfl [vmem:[#allocation1 + $0x8] sm:$0xff pattern:$0x73625140]
    %v457 = vld.sshfl [vmem:[#allocation1 + $0x10] sm:$0xff pattern:$0x73625140]
    %v458 = vld.sshfl [vmem:[#allocation1 + $0x18] sm:$0xff pattern:$0x73625140]
    %v459 = vld.sshfl [vmem:[#allocation1 + $0x20] sm:$0xff pattern:$0x73625140]
    %v460 = vld.sshfl [vmem:[#allocation1 + $0x28] sm:$0xff pattern:$0x73625140]
    %v461 = vld.sshfl [vmem:[#allocation1 + $0x30] sm:$0xff pattern:$0x73625140]
    %v462 = vld.sshfl [vmem:[#allocation1 + $0x38] sm:$0xff pattern:$0x73625140]
    %463 = vst [vmem:[#allocation1] ss:$4 sm:$0xff] %v406
    %464 = vst [vmem:[%s433] ss:$4 sm:$0xff] %v407
    %v465 = vld.sshfl [vmem:[#allocation1] sm:$0xff pattern:$0x73625140]
    %v466 = vld.sshfl [vmem:[#allocation1 + $0x8] sm:$0xff pattern:$0x73625140]
    %v467 = vld.sshfl [vmem:[#allocation1 + $0x10] sm:$0xff pattern:$0x73625140]
    %v468 = vld.sshfl [vmem:[#allocation1 + $0x18] sm:$0xff pattern:$0x73625140]
    %v469 = vld.sshfl [vmem:[#allocation1 + $0x20] sm:$0xff pattern:$0x73625140]
    %v470 = vld.sshfl [vmem:[#allocation1 + $0x28] sm:$0xff pattern:$0x73625140]
    %v471 = vld.sshfl [vmem:[#allocation1 + $0x30] sm:$0xff pattern:$0x73625140]
    %v472 = vld.sshfl [vmem:[#allocation1 + $0x38] sm:$0xff pattern:$0x73625140]
    %473 = vst [vmem:[#allocation1] ss:$4 sm:$0xff] %v408
    %474 = vst [vmem:[%s433] ss:$4 sm:$0xff] %v409
    %v475 = vld.sshfl [vmem:[#allocation1] sm:$0xff pattern:$0x73625140]
    %v476 = vld.sshfl [vmem:[#allocation1 + $0x8] sm:$0xff pattern:$0x73625140]
    %v477 = vld.sshfl [vmem:[#allocation1 + $0x10] sm:$0xff pattern:$0x73625140]
    %v478 = vld.sshfl [vmem:[#allocation1 + $0x18] sm:$0xff pattern:$0x73625140]
    %v479 = vld.sshfl [vmem:[#allocation1 + $0x20] sm:$0xff pattern:$0x73625140]
    %v480 = vld.sshfl [vmem:[#allocation1 + $0x28] sm:$0xff pattern:$0x73625140]
    %v481 = vld.sshfl [vmem:[#allocation1 + $0x30] sm:$0xff pattern:$0x73625140]
    %v482 = vld.sshfl [vmem:[#allocation1 + $0x38] sm:$0xff pattern:$0x73625140]
    %483 = vst [vmem:[#allocation1] ss:$4 sm:$0xff] %v410
    %484 = vst [vmem:[%s433] ss:$4 sm:$0xff] %v411
    %v485 = vld.sshfl [vmem:[#allocation1] sm:$0xff pattern:$0x73625140]
    %v486 = vld.sshfl [vmem:[#allocation1 + $0x8] sm:$0xff pattern:$0x73625140]
    %v487 = vld.sshfl [vmem:[#allocation1 + $0x10] sm:$0xff pattern:$0x73625140]
    %v488 = vld.sshfl [vmem:[#allocation1 + $0x18] sm:$0xff pattern:$0x73625140]
    %v489 = vld.sshfl [vmem:[#allocation1 + $0x20] sm:$0xff pattern:$0x73625140]
    %v490 = vld.sshfl [vmem:[#allocation1 + $0x28] sm:$0xff pattern:$0x73625140]
    %v491 = vld.sshfl [vmem:[#allocation1 + $0x30] sm:$0xff pattern:$0x73625140]
    %v492 = vld.sshfl [vmem:[#allocation1 + $0x38] sm:$0xff pattern:$0x73625140]
    %493 = vst [vmem:[#allocation1] ss:$4 sm:$0xff] %v412
    %494 = vst [vmem:[%s433] ss:$4 sm:$0xff] %v413
    %v495 = vld.sshfl [vmem:[#allocation1] sm:$0xff pattern:$0x73625140]
    %v496 = vld.sshfl [vmem:[#allocation1 + $0x8] sm:$0xff pattern:$0x73625140]
    %v497 = vld.sshfl [vmem:[#allocation1 + $0x10] sm:$0xff pattern:$0x73625140]
    %v498 = vld.sshfl [vmem:[#allocation1 + $0x18] sm:$0xff pattern:$0x73625140]
    %v499 = vld.sshfl [vmem:[#allocation1 + $0x20] sm:$0xff pattern:$0x73625140]
    %v500 = vld.sshfl [vmem:[#allocation1 + $0x28] sm:$0xff pattern:$0x73625140]
    %v501 = vld.sshfl [vmem:[#allocation1 + $0x30] sm:$0xff pattern:$0x73625140]
    %v502 = vld.sshfl [vmem:[#allocation1 + $0x38] sm:$0xff pattern:$0x73625140]
    %503 = vst [vmem:[#allocation1] ss:$4 sm:$0xff] %v414
    %504 = vst [vmem:[%s433] ss:$4 sm:$0xff] %v415
    %v505 = vld.sshfl [vmem:[#allocation1] sm:$0xff pattern:$0x73625140]
    %v506 = vld.sshfl [vmem:[#allocation1 + $0x8] sm:$0xff pattern:$0x73625140]
    %v507 = vld.sshfl [vmem:[#allocation1 + $0x10] sm:$0xff pattern:$0x73625140]
    %v508 = vld.sshfl [vmem:[#allocation1 + $0x18] sm:$0xff pattern:$0x73625140]
    %v509 = vld.sshfl [vmem:[#allocation1 + $0x20] sm:$0xff pattern:$0x73625140]
    %v510 = vld.sshfl [vmem:[#allocation1 + $0x28] sm:$0xff pattern:$0x73625140]
    %v511 = vld.sshfl [vmem:[#allocation1 + $0x30] sm:$0xff pattern:$0x73625140]
    %v512 = vld.sshfl [vmem:[#allocation1 + $0x38] sm:$0xff pattern:$0x73625140]
    %v577 = vsel %vm202, %v435, 0.0
    %v578 = vsel %vm202, %v455, 0.0
    %v579 = vadd.f32 %v577, %v578
    %v580 = vsel %vm202, %v475, 0.0
    %v581 = vadd.f32 %v579, %v580
    %v582 = vsel %vm202, %v495, 0.0
    %v583 = vadd.f32 %v581, %v582
    %v584 = vsel %vm202, %v436, 0.0
    %v585 = vsel %vm202, %v456, 0.0
    %v586 = vadd.f32 %v584, %v585
    %v587 = vsel %vm202, %v476, 0.0
    %v588 = vadd.f32 %v586, %v587
    %v589 = vsel %vm202, %v496, 0.0
    %v590 = vadd.f32 %v588, %v589
    %v591 = vsel %vm202, %v437, 0.0
    %v592 = vsel %vm202, %v457, 0.0
    %v593 = vadd.f32 %v591, %v592
    %v594 = vsel %vm202, %v477, 0.0
    %v595 = vadd.f32 %v593, %v594
    %v596 = vsel %vm202, %v497, 0.0
    %v597 = vadd.f32 %v595, %v596
    %v598 = vsel %vm202, %v438, 0.0
    %v599 = vsel %vm202, %v458, 0.0
    %v600 = vadd.f32 %v598, %v599
    %v601 = vsel %vm202, %v478, 0.0
    %v602 = vadd.f32 %v600, %v601
    %v603 = vsel %vm202, %v498, 0.0
    %v604 = vadd.f32 %v602, %v603
    %v605 = vsel %vm202, %v439, 0.0
    %v606 = vsel %vm202, %v459, 0.0
    %v607 = vadd.f32 %v605, %v606
    %v608 = vsel %vm202, %v479, 0.0
    %v609 = vadd.f32 %v607, %v608
    %v610 = vsel %vm202, %v499, 0.0
    %v611 = vadd.f32 %v609, %v610
    %v612 = vsel %vm202, %v440, 0.0
    %v613 = vsel %vm202, %v460, 0.0
    %v614 = vadd.f32 %v612, %v613
    %v615 = vsel %vm202, %v480, 0.0
    %v616 = vadd.f32 %v614, %v615
    %v617 = vsel %vm202, %v500, 0.0
    %v618 = vadd.f32 %v616, %v617
    %v619 = vsel %vm202, %v441, 0.0
    %v620 = vsel %vm202, %v461, 0.0
    %v621 = vadd.f32 %v619, %v620
    %v622 = vsel %vm202, %v481, 0.0
    %v623 = vadd.f32 %v621, %v622
    %v624 = vsel %vm202, %v501, 0.0
    %v625 = vadd.f32 %v623, %v624
    %v626 = vsel %vm202, %v442, 0.0
    %v627 = vsel %vm202, %v462, 0.0
    %v628 = vadd.f32 %v626, %v627
    %v629 = vsel %vm202, %v482, 0.0
    %v630 = vadd.f32 %v628, %v629
    %v631 = vsel %vm202, %v502, 0.0
    %v632 = vadd.f32 %v630, %v631
    %v633 = vsel %vm202, %v445, 0.0
    %v634 = vsel %vm202, %v465, 0.0
    %v635 = vadd.f32 %v633, %v634
    %v636 = vsel %vm202, %v485, 0.0
    %v637 = vadd.f32 %v635, %v636
    %v638 = vsel %vm202, %v505, 0.0
    %v639 = vadd.f32 %v637, %v638
    %v640 = vsel %vm202, %v446, 0.0
    %v641 = vsel %vm202, %v466, 0.0
    %v642 = vadd.f32 %v640, %v641
    %v643 = vsel %vm202, %v486, 0.0
    %v644 = vadd.f32 %v642, %v643
    %v645 = vsel %vm202, %v506, 0.0
    %v646 = vadd.f32 %v644, %v645
    %v647 = vsel %vm202, %v447, 0.0
    %v648 = vsel %vm202, %v467, 0.0
    %v649 = vadd.f32 %v647, %v648
    %v650 = vsel %vm202, %v487, 0.0
    %v651 = vadd.f32 %v649, %v650
    %v652 = vsel %vm202, %v507, 0.0
    %v653 = vadd.f32 %v651, %v652
    %v654 = vsel %vm202, %v448, 0.0
    %v655 = vsel %vm202, %v468, 0.0
    %v656 = vadd.f32 %v654, %v655
    %v657 = vsel %vm202, %v488, 0.0
    %v658 = vadd.f32 %v656, %v657
    %v659 = vsel %vm202, %v508, 0.0
    %v660 = vadd.f32 %v658, %v659
    %v661 = vsel %vm202, %v449, 0.0
    %v662 = vsel %vm202, %v469, 0.0
    %v663 = vadd.f32 %v661, %v662
    %v664 = vsel %vm202, %v489, 0.0
    %v665 = vadd.f32 %v663, %v664
    %v666 = vsel %vm202, %v509, 0.0
    %v667 = vadd.f32 %v665, %v666
    %v668 = vsel %vm202, %v450, 0.0
    %v669 = vsel %vm202, %v470, 0.0
    %v670 = vadd.f32 %v668, %v669
    %v671 = vsel %vm202, %v490, 0.0
    %v672 = vadd.f32 %v670, %v671
    %v673 = vsel %vm202, %v510, 0.0
    %v674 = vadd.f32 %v672, %v673
    %v675 = vsel %vm202, %v451, 0.0
    %v676 = vsel %vm202, %v471, 0.0
    %v677 = vadd.f32 %v675, %v676
    %v678 = vsel %vm202, %v491, 0.0
    %v679 = vadd.f32 %v677, %v678
    %v680 = vsel %vm202, %v511, 0.0
    %v681 = vadd.f32 %v679, %v680
    %v682 = vsel %vm202, %v452, 0.0
    %v683 = vsel %vm202, %v472, 0.0
    %v684 = vadd.f32 %v682, %v683
    %v685 = vsel %vm202, %v492, 0.0
    %v686 = vadd.f32 %v684, %v685
    %v687 = vsel %vm202, %v512, 0.0
    %v688 = vadd.f32 %v686, %v687
    %v689 = vmul.f32 %v583, %v321
    %v690 = vmul.f32 %v590, %v321
    %v691 = vmul.f32 %v597, %v321
    %v692 = vmul.f32 %v604, %v321
    %v693 = vmul.f32 %v611, %v321
    %v694 = vmul.f32 %v618, %v321
    %v695 = vmul.f32 %v625, %v321
    %v696 = vmul.f32 %v632, %v321
    %v697 = vmul.f32 %v639, %v321
    %v698 = vmul.f32 %v646, %v321
    %v699 = vmul.f32 %v653, %v321
    %v700 = vmul.f32 %v660, %v321
    %v701 = vmul.f32 %v667, %v321
    %v702 = vmul.f32 %v674, %v321
    %v703 = vmul.f32 %v681, %v321
    %v704 = vmul.f32 %v688, %v321
    %v705 = vadd.f32 %v689, 1e-08
    %v706 = vadd.f32 %v690, 1e-08
    %v707 = vadd.f32 %v691, 1e-08
    %v708 = vadd.f32 %v692, 1e-08
    %v709 = vadd.f32 %v693, 1e-08
    %v710 = vadd.f32 %v694, 1e-08
    %v711 = vadd.f32 %v695, 1e-08
    %v712 = vadd.f32 %v696, 1e-08
    %v713 = vadd.f32 %v697, 1e-08
    %v714 = vadd.f32 %v698, 1e-08
    %v715 = vadd.f32 %v699, 1e-08
    %v716 = vadd.f32 %v700, 1e-08
    %v717 = vadd.f32 %v701, 1e-08
    %v718 = vadd.f32 %v702, 1e-08
    %v719 = vadd.f32 %v703, 1e-08
    %v720 = vadd.f32 %v704, 1e-08
    %v721 = vrsqrt.pop %v705
    %v722 = vmul.f32 %v721, %v705
    %v723 = vmul.f32 %v722, %v721
    %v724 = vmul.f32 0.5, %v723
    %v725 = vsub.f32 1.5, %v724
    %v726 = vmul.f32 %v721, %v725
    %v727 = vmul.f32 %v705, %v726
    %vm728 = vcmp.eq.f32.partialorder %v705, inf
    %v729 = vsel %vm728, %v705, %v727
    %vm730 = vcmp.eq.f32.partialorder %v705, 0.0
    %v731 = vand.u32 %v705, 2147483648
    %v732 = vsel %vm730, %v731, %v729
    %v733 = vrsqrt.pop %v706
    %v734 = vmul.f32 %v733, %v706
    %v735 = vmul.f32 %v734, %v733
    %v736 = vmul.f32 0.5, %v735
    %v737 = vsub.f32 1.5, %v736
    %v738 = vmul.f32 %v733, %v737
    %v739 = vmul.f32 %v706, %v738
    %vm740 = vcmp.eq.f32.partialorder %v706, inf
    %v741 = vsel %vm740, %v706, %v739
    %vm742 = vcmp.eq.f32.partialorder %v706, 0.0
    %v743 = vand.u32 %v706, 2147483648
    %v744 = vsel %vm742, %v743, %v741
    %v745 = vrsqrt.pop %v707
    %v746 = vmul.f32 %v745, %v707
    %v747 = vmul.f32 %v746, %v745
    %v748 = vmul.f32 0.5, %v747
    %v749 = vsub.f32 1.5, %v748
    %v750 = vmul.f32 %v745, %v749
    %v751 = vmul.f32 %v707, %v750
    %vm752 = vcmp.eq.f32.partialorder %v707, inf
    %v753 = vsel %vm752, %v707, %v751
    %vm754 = vcmp.eq.f32.partialorder %v707, 0.0
    %v755 = vand.u32 %v707, 2147483648
    %v756 = vsel %vm754, %v755, %v753
    %v757 = vrsqrt.pop %v708
    %v758 = vmul.f32 %v757, %v708
    %v759 = vmul.f32 %v758, %v757
    %v760 = vmul.f32 0.5, %v759
    %v761 = vsub.f32 1.5, %v760
    %v762 = vmul.f32 %v757, %v761
    %v763 = vmul.f32 %v708, %v762
    %vm764 = vcmp.eq.f32.partialorder %v708, inf
    %v765 = vsel %vm764, %v708, %v763
    %vm766 = vcmp.eq.f32.partialorder %v708, 0.0
    %v767 = vand.u32 %v708, 2147483648
    %v768 = vsel %vm766, %v767, %v765
    %v769 = vrsqrt.pop %v709
    %v770 = vmul.f32 %v769, %v709
    %v771 = vmul.f32 %v770, %v769
    %v772 = vmul.f32 0.5, %v771
    %v773 = vsub.f32 1.5, %v772
    %v774 = vmul.f32 %v769, %v773
    %v775 = vmul.f32 %v709, %v774
    %vm776 = vcmp.eq.f32.partialorder %v709, inf
    %v777 = vsel %vm776, %v709, %v775
    %vm778 = vcmp.eq.f32.partialorder %v709, 0.0
    %v779 = vand.u32 %v709, 2147483648
    %v780 = vsel %vm778, %v779, %v777
    %v781 = vrsqrt.pop %v710
    %v782 = vmul.f32 %v781, %v710
    %v783 = vmul.f32 %v782, %v781
    %v784 = vmul.f32 0.5, %v783
    %v785 = vsub.f32 1.5, %v784
    %v786 = vmul.f32 %v781, %v785
    %v787 = vmul.f32 %v710, %v786
    %vm788 = vcmp.eq.f32.partialorder %v710, inf
    %v789 = vsel %vm788, %v710, %v787
    %vm790 = vcmp.eq.f32.partialorder %v710, 0.0
    %v791 = vand.u32 %v710, 2147483648
    %v792 = vsel %vm790, %v791, %v789
    %v793 = vrsqrt.pop %v711
    %v794 = vmul.f32 %v793, %v711
    %v795 = vmul.f32 %v794, %v793
    %v796 = vmul.f32 0.5, %v795
    %v797 = vsub.f32 1.5, %v796
    %v798 = vmul.f32 %v793, %v797
    %v799 = vmul.f32 %v711, %v798
    %vm800 = vcmp.eq.f32.partialorder %v711, inf
    %v801 = vsel %vm800, %v711, %v799
    %vm802 = vcmp.eq.f32.partialorder %v711, 0.0
    %v803 = vand.u32 %v711, 2147483648
    %v804 = vsel %vm802, %v803, %v801
    %v805 = vrsqrt.pop %v712
    %v806 = vmul.f32 %v805, %v712
    %v807 = vmul.f32 %v806, %v805
    %v808 = vmul.f32 0.5, %v807
    %v809 = vsub.f32 1.5, %v808
    %v810 = vmul.f32 %v805, %v809
    %v811 = vmul.f32 %v712, %v810
    %vm812 = vcmp.eq.f32.partialorder %v712, inf
    %v813 = vsel %vm812, %v712, %v811
    %vm814 = vcmp.eq.f32.partialorder %v712, 0.0
    %v815 = vand.u32 %v712, 2147483648
    %v816 = vsel %vm814, %v815, %v813
    %v817 = vrsqrt.pop %v713
    %v818 = vmul.f32 %v817, %v713
    %v819 = vmul.f32 %v818, %v817
    %v820 = vmul.f32 0.5, %v819
    %v821 = vsub.f32 1.5, %v820
    %v822 = vmul.f32 %v817, %v821
    %v823 = vmul.f32 %v713, %v822
    %vm824 = vcmp.eq.f32.partialorder %v713, inf
    %v825 = vsel %vm824, %v713, %v823
    %vm826 = vcmp.eq.f32.partialorder %v713, 0.0
    %v827 = vand.u32 %v713, 2147483648
    %v828 = vsel %vm826, %v827, %v825
    %v829 = vrsqrt.pop %v714
    %v830 = vmul.f32 %v829, %v714
    %v831 = vmul.f32 %v830, %v829
    %v832 = vmul.f32 0.5, %v831
    %v833 = vsub.f32 1.5, %v832
    %v834 = vmul.f32 %v829, %v833
    %v835 = vmul.f32 %v714, %v834
    %vm836 = vcmp.eq.f32.partialorder %v714, inf
    %v837 = vsel %vm836, %v714, %v835
    %vm838 = vcmp.eq.f32.partialorder %v714, 0.0
    %v839 = vand.u32 %v714, 2147483648
    %v840 = vsel %vm838, %v839, %v837
    %v841 = vrsqrt.pop %v715
    %v842 = vmul.f32 %v841, %v715
    %v843 = vmul.f32 %v842, %v841
    %v844 = vmul.f32 0.5, %v843
    %v845 = vsub.f32 1.5, %v844
    %v846 = vmul.f32 %v841, %v845
    %v847 = vmul.f32 %v715, %v846
    %vm848 = vcmp.eq.f32.partialorder %v715, inf
    %v849 = vsel %vm848, %v715, %v847
    %vm850 = vcmp.eq.f32.partialorder %v715, 0.0
    %v851 = vand.u32 %v715, 2147483648
    %v852 = vsel %vm850, %v851, %v849
    %v853 = vrsqrt.pop %v716
    %v854 = vmul.f32 %v853, %v716
    %v855 = vmul.f32 %v854, %v853
    %v856 = vmul.f32 0.5, %v855
    %v857 = vsub.f32 1.5, %v856
    %v858 = vmul.f32 %v853, %v857
    %v859 = vmul.f32 %v716, %v858
    %vm860 = vcmp.eq.f32.partialorder %v716, inf
    %v861 = vsel %vm860, %v716, %v859
    %vm862 = vcmp.eq.f32.partialorder %v716, 0.0
    %v863 = vand.u32 %v716, 2147483648
    %v864 = vsel %vm862, %v863, %v861
    %v865 = vrsqrt.pop %v717
    %v866 = vmul.f32 %v865, %v717
    %v867 = vmul.f32 %v866, %v865
    %v868 = vmul.f32 0.5, %v867
    %v869 = vsub.f32 1.5, %v868
    %v870 = vmul.f32 %v865, %v869
    %v871 = vmul.f32 %v717, %v870
    %vm872 = vcmp.eq.f32.partialorder %v717, inf
    %v873 = vsel %vm872, %v717, %v871
    %vm874 = vcmp.eq.f32.partialorder %v717, 0.0
    %v875 = vand.u32 %v717, 2147483648
    %v876 = vsel %vm874, %v875, %v873
    %v877 = vrsqrt.pop %v718
    %v878 = vmul.f32 %v877, %v718
    %v879 = vmul.f32 %v878, %v877
    %v880 = vmul.f32 0.5, %v879
    %v881 = vsub.f32 1.5, %v880
    %v882 = vmul.f32 %v877, %v881
    %v883 = vmul.f32 %v718, %v882
    %vm884 = vcmp.eq.f32.partialorder %v718, inf
    %v885 = vsel %vm884, %v718, %v883
    %vm886 = vcmp.eq.f32.partialorder %v718, 0.0
    %v887 = vand.u32 %v718, 2147483648
    %v888 = vsel %vm886, %v887, %v885
    %v889 = vrsqrt.pop %v719
    %v890 = vmul.f32 %v889, %v719
    %v891 = vmul.f32 %v890, %v889
    %v892 = vmul.f32 0.5, %v891
    %v893 = vsub.f32 1.5, %v892
    %v894 = vmul.f32 %v889, %v893
    %v895 = vmul.f32 %v719, %v894
    %vm896 = vcmp.eq.f32.partialorder %v719, inf
    %v897 = vsel %vm896, %v719, %v895
    %vm898 = vcmp.eq.f32.partialorder %v719, 0.0
    %v899 = vand.u32 %v719, 2147483648
    %v900 = vsel %vm898, %v899, %v897
    %v901 = vrsqrt.pop %v720
    %v902 = vmul.f32 %v901, %v720
    %v903 = vmul.f32 %v902, %v901
    %v904 = vmul.f32 0.5, %v903
    %v905 = vsub.f32 1.5, %v904
    %v906 = vmul.f32 %v901, %v905
    %v907 = vmul.f32 %v720, %v906
    %vm908 = vcmp.eq.f32.partialorder %v720, inf
    %v909 = vsel %vm908, %v720, %v907
    %vm910 = vcmp.eq.f32.partialorder %v720, 0.0
    %v911 = vand.u32 %v720, 2147483648
    %v912 = vsel %vm910, %v911, %v909
    %v913 = vsel %vm202, %v732, 0.0
    %v914 = vsel %vm202, %v744, 0.0
    %v915 = vadd.f32 %v913, %v914
    %v916 = vsel %vm202, %v756, 0.0
    %v917 = vadd.f32 %v915, %v916
    %v918 = vsel %vm202, %v768, 0.0
    %v919 = vadd.f32 %v917, %v918
    %v920 = vsel %vm202, %v780, 0.0
    %v921 = vadd.f32 %v919, %v920
    %v922 = vsel %vm202, %v792, 0.0
    %v923 = vadd.f32 %v921, %v922
    %v924 = vsel %vm202, %v804, 0.0
    %v925 = vadd.f32 %v923, %v924
    %v926 = vsel %vm202, %v816, 0.0
    %v927 = vadd.f32 %v925, %v926
    %v928 = vsel %vm202, %v828, 0.0
    %v929 = vadd.f32 %v927, %v928
    %v930 = vsel %vm202, %v840, 0.0
    %v931 = vadd.f32 %v929, %v930
    %v932 = vsel %vm202, %v852, 0.0
    %v933 = vadd.f32 %v931, %v932
    %v934 = vsel %vm202, %v864, 0.0
    %v935 = vadd.f32 %v933, %v934
    %v936 = vsel %vm202, %v876, 0.0
    %v937 = vadd.f32 %v935, %v936
    %v938 = vsel %vm202, %v888, 0.0
    %v939 = vadd.f32 %v937, %v938
    %v940 = vsel %vm202, %v900, 0.0
    %v941 = vadd.f32 %v939, %v940
    %v942 = vsel %vm202, %v912, 0.0
    %v943 = vadd.f32 %v941, %v942
    %944 = vadd.xlane.f32.xlu0 %v943
    %v945 = vpop.xlane.xlu0 %944
    %v946 = vrcp.pop 2048.0
    %v947 = vmul.f32 2048.0, %v946
    %v948 = vsub.f32 1.0, %v947
    %v949 = vmul.f32 %v946, %v948
    %v950 = vadd.f32 %v946, %v949
    %vm951 = vweird.f32 %v946
    %v952 = vsel %vm951, %v946, %v950
    %v953 = vmul.f32 %v945, %v952
    %v955 = vlaneseq
    %v956 = vand.u32 %v955, 127
    %v957 = vperm.slane %v953, %v956
    %vm959 = vcmask 8192
    %960 = vst.msk [vmem:[#allocation5] sm:$0x1] %vm959, %v957
    // Predicated region
    $region10: #{tpu_custom_call.1} parent=1 // pred_check
      _
    $region11: #{tpu_custom_call.1} parent=1 // pred_check_branch
      %962 = sbr.rel (0) target = $region13
    $region12: #{tpu_custom_call.1} parent=1 // pred_region
      %964 = vsyncadd [#allocation4], 0
      %s966 = sshll.u32 [#allocation5], 4
      %s967 = int_to_ptr.vmem [resolvable:$true] %s966
      %s968 = sshll.u32 %s1, 4
      %s969 = int_to_ptr.hbm [resolvable:$true] %s968
      %971 = dma.vmem_to_hbm [thread:$0]  %s967, 16, %s969, [#allocation4]
    $region13: #{tpu_custom_call.1} parent=1 // pred_fallthru
      _
    // Predicated region
    $region14: #{tpu_custom_call.1} parent=1 // pred_check
      _
    $region15: #{tpu_custom_call.1} parent=1 // pred_check_branch
      %973 = sbr.rel (0) target = $region17
    $region16: #{tpu_custom_call.1} parent=1 // pred_region
      %975 = dma.done [#allocation4], 16
    $region17: #{tpu_custom_call.1} parent=1 // pred_fallthru
      _
    %976 = vsyncpa [#allocation3], 1
    %977 = vsyncpa [#allocation4], 1

</llo_original>
